<compile_context>
chip_gen: v7x
topology: tpu7x:2x2x1
jax: 0.10.0
libtpu: 0.0.40
codegen_flags: <defaults>
</compile_context>

<pallas_src>
import functools

import jax
import jax.numpy as jnp
from jax.experimental import pallas as pl
from jax.experimental.pallas import tpu as pltpu


def _round_up(x, m):
    return ((x + m - 1) // m) * m


def gmm_encoder_kernel(x_ref, w1_ref, b1_ref, w3_ref, b3_ref, out_ref, *, n_classes):
    # x_ref  : [tile_B, D]       streamed per grid step
    # w1_ref : [D, H_pad]        resident (index_map -> (0,0)), zero-padded hidden cols
    # b1_ref : [1, H_pad]        resident
    # w3_ref : [H_pad, C_pad]    resident, zero-padded rows/cols
    # b3_ref : [1, C_pad]        resident
    # out_ref: [tile_B, C_pad]   lane-dense (C_pad is a multiple of 128)
    x = x_ref[...]

    # fc1 + ReLU (MXU matmul, f32 accumulation). Padded hidden columns compute
    # relu(0 + 0) = 0, so they are inert downstream.
    h = jnp.dot(x, w1_ref[...], preferred_element_type=jnp.float32) + b1_ref[...]
    h = jnp.maximum(h, 0.0)

    # fc3 + clamp to [-8, 8]. Padded hidden rows of W3 are zero -> no contribution.
    logits = jnp.dot(h, w3_ref[...], preferred_element_type=jnp.float32) + b3_ref[...]
    logits = jnp.clip(logits, -8.0, 8.0)

    # Mask padded class columns AFTER the clamp (the clamp would otherwise pull
    # them up to -8 and pollute the softmax denominator).
    col = jax.lax.broadcasted_iota(jnp.int32, logits.shape, dimension=1)
    logits = jnp.where(col < n_classes, logits, -1e30)

    # Numerically stable log_softmax over the class axis.
    m = jnp.max(logits, axis=-1, keepdims=True)
    shifted = logits - m
    lse = jnp.log(jnp.sum(jnp.exp(shifted), axis=-1, keepdims=True))
    # NOTE: could cast to bf16 here to halve HBM writeback if consumers allow it.
    out_ref[...] = (shifted - lse).astype(out_ref.dtype)


def init_params(key, data_dim, hidden_dim, n_classes):
    """torch.nn.Linear-style init; weights stored as (in, out) = W.T vs torch."""
    k1, k2, k3, k4 = jax.random.split(key, 4)
    lim1 = 1.0 / jnp.sqrt(data_dim)
    lim3 = 1.0 / jnp.sqrt(hidden_dim)
    w1 = jax.random.uniform(k1, (data_dim, hidden_dim), jnp.float32, -lim1, lim1)
    b1 = jax.random.uniform(k2, (1, hidden_dim), jnp.float32, -lim1, lim1)
    w3 = jax.random.uniform(k3, (hidden_dim, n_classes), jnp.float32, -lim3, lim3)
    b3 = jax.random.uniform(k4, (1, n_classes), jnp.float32, -lim3, lim3)
    # TODO(synk): fc2 exists in the torch module's __init__ but is never used in
    # forward(); intentionally omitted.
    return w1, b1, w3, b3


def pad_params(w1, b1, w3, b3):
    """Zero-pad hidden / class dims up to the 128-lane width ONCE (amortized),
    so both matmuls and the output store are lane-dense inside the kernel."""
    D, H = w1.shape
    C = w3.shape[1]
    H_pad = _round_up(H, 128)
    C_pad = _round_up(C, 128)
    w1p = jnp.zeros((D, H_pad), jnp.float32).at[:, :H].set(w1)
    b1p = jnp.zeros((1, H_pad), jnp.float32).at[:, :H].set(b1)
    w3p = jnp.zeros((H_pad, C_pad), jnp.float32).at[:H, :C].set(w3)
    b3p = jnp.zeros((1, C_pad), jnp.float32).at[:, :C].set(b3)
    return w1p, b1p, w3p, b3p


def gmm_encoder_forward(x, w1p, b1p, w3p, b3p, n_classes, *, tile_b=512):
    """Forward pass. `w1p/b1p/w3p/b3p` are the 128-padded params from pad_params."""
    B, D = x.shape
    H_pad = w1p.shape[1]
    C_pad = w3p.shape[1]
    assert w1p.shape == (D, H_pad) and b1p.shape == (1, H_pad)
    assert w3p.shape == (H_pad, C_pad) and b3p.shape == (1, C_pad)
    assert H_pad % 128 == 0 and C_pad % 128 == 0

    # Batch tiling: tile must be a multiple of 8 (sublane rule); pad the batch
    # up to a multiple of the tile and slice padded rows off afterwards.
    tile_b = _round_up(min(tile_b, _round_up(B, 8)), 8)
    B_pad = _round_up(B, tile_b)
    xp = x if B_pad == B else jnp.pad(x, ((0, B_pad - B), (0, 0)))
    grid = (B_pad // tile_b,)

    kernel = functools.partial(gmm_encoder_kernel, n_classes=n_classes)
    out_padded = pl.pallas_call(
        kernel,
        out_shape=jax.ShapeDtypeStruct((B_pad, C_pad), jnp.float32),
        grid=grid,
        in_specs=[
            pl.BlockSpec((tile_b, D), lambda i: (i, 0)),       # streamed x rows
            pl.BlockSpec((D, H_pad), lambda i: (0, 0)),        # resident W1
            pl.BlockSpec((1, H_pad), lambda i: (0, 0)),        # resident b1
            pl.BlockSpec((H_pad, C_pad), lambda i: (0, 0)),    # resident W3
            pl.BlockSpec((1, C_pad), lambda i: (0, 0)),        # resident b3
        ],
        out_specs=pl.BlockSpec((tile_b, C_pad), lambda i: (i, 0)),
        compiler_params=pltpu.CompilerParams(
            dimension_semantics=("parallel",),  # shard batch tiles across TCs (v7x)
        ),
    )(xp, w1p, b1p, w3p, b3p)

    return out_padded[:B, :n_classes]


def reference_forward(x, w1, b1, w3, b3):
    h = jnp.maximum(x @ w1 + b1, 0.0)
    logits = jnp.clip(h @ w3 + b3, -8.0, 8.0)
    return jax.nn.log_softmax(logits, axis=1)


if __name__ == "__main__":
    key = jax.random.PRNGKey(0)
    kx, kp = jax.random.split(key)

    batch, data_dim, hidden_dim, n_classes = 200, 16, 32, 10
    x = jax.random.normal(kx, (batch, data_dim), jnp.float32)
    w1, b1, w3, b3 = init_params(kp, data_dim, hidden_dim, n_classes)
    w1p, b1p, w3p, b3p = pad_params(w1, b1, w3, b3)

    # Small tile here just to exercise the multi-step batch grid + batch padding;
    # production default is tile_b=512.
    out = gmm_encoder_forward(x, w1p, b1p, w3p, b3p, n_classes, tile_b=64)
    out = jax.block_until_ready(out)

    ref = reference_forward(x, w1, b1, w3, b3)
    assert out.shape == (batch, n_classes)
    assert jnp.allclose(out, ref, atol=1e-5, rtol=1e-5), "mismatch vs reference"

    print("KERNEL_OK")
</pallas_src>

<mosaic_0001>
module attributes {stable_mosaic.version = 11 : i64} {
  func.func @gmm_encoder_kernel(%arg0: i32, %arg1: memref<64x16xf32, #tpu.memory_space<vmem>>, %arg2: memref<16x128xf32, #tpu.memory_space<vmem>>, %arg3: memref<1x128xf32, #tpu.memory_space<vmem>>, %arg4: memref<128x128xf32, #tpu.memory_space<vmem>>, %arg5: memref<1x128xf32, #tpu.memory_space<vmem>>, %arg6: memref<64x128xf32, #tpu.memory_space<vmem>>) attributes {dimension_semantics = [#tpu.dimension_semantics<parallel>], iteration_bounds = array<i64: 4>, scalar_prefetch = 0 : i64, scratch_operands = 0 : i64, tpu.core_type = #tpu.core_type<tc>, window_params = [{transform_indices = @transform_0, window_bounds = array<i64: 64, 16>}, {pipeline_mode = #tpu.pipeline_mode<synchronous>, transform_indices = @transform_1, window_bounds = array<i64: 16, 128>}, {pipeline_mode = #tpu.pipeline_mode<synchronous>, transform_indices = @transform_2, window_bounds = array<i64: 1, 128>}, {pipeline_mode = #tpu.pipeline_mode<synchronous>, transform_indices = @transform_3, window_bounds = array<i64: 128, 128>}, {pipeline_mode = #tpu.pipeline_mode<synchronous>, transform_indices = @transform_4, window_bounds = array<i64: 1, 128>}, {transform_indices = @transform_5, window_bounds = array<i64: 64, 128>}]} {
    %c0 = arith.constant 0 : index
    %c0_0 = arith.constant 0 : index
    %0 = vector.load %arg1[%c0, %c0_0] : memref<64x16xf32, #tpu.memory_space<vmem>>, vector<64x16xf32>
    %c0_1 = arith.constant 0 : index
    %c0_2 = arith.constant 0 : index
    %1 = vector.load %arg2[%c0_1, %c0_2] : memref<16x128xf32, #tpu.memory_space<vmem>>, vector<16x128xf32>
    %cst = arith.constant dense<0.000000e+00> : vector<64x128xf32>
    %2 = tpu.matmul %0, %1, %cst {dimension_numbers = #tpu.dot_dimension_numbers<[1], [0], [0], [1], [0, 0, 1, 1], [], []>} : vector<64x16xf32>, vector<16x128xf32>, vector<64x128xf32> -> vector<64x128xf32>
    %c0_3 = arith.constant 0 : index
    %c0_4 = arith.constant 0 : index
    %3 = vector.load %arg3[%c0_3, %c0_4] : memref<1x128xf32, #tpu.memory_space<vmem>>, vector<1x128xf32>
    %4 = vector.broadcast %3 : vector<1x128xf32> to vector<64x128xf32>
    %5 = arith.addf %2, %4 : vector<64x128xf32>
    %cst_5 = arith.constant 0.000000e+00 : f32
    %6 = vector.broadcast %cst_5 : f32 to vector<64x128xf32>
    %7 = arith.maximumf %5, %6 : vector<64x128xf32>
    %c0_6 = arith.constant 0 : index
    %c0_7 = arith.constant 0 : index
    %8 = vector.load %arg4[%c0_6, %c0_7] : memref<128x128xf32, #tpu.memory_space<vmem>>, vector<128x128xf32>
    %cst_8 = arith.constant dense<0.000000e+00> : vector<64x128xf32>
    %9 = tpu.matmul %7, %8, %cst_8 {dimension_numbers = #tpu.dot_dimension_numbers<[1], [0], [0], [1], [0, 0, 1, 1], [], []>} : vector<64x128xf32>, vector<128x128xf32>, vector<64x128xf32> -> vector<64x128xf32>
    %c0_9 = arith.constant 0 : index
    %c0_10 = arith.constant 0 : index
    %10 = vector.load %arg5[%c0_9, %c0_10] : memref<1x128xf32, #tpu.memory_space<vmem>>, vector<1x128xf32>
    %11 = vector.broadcast %10 : vector<1x128xf32> to vector<64x128xf32>
    %12 = arith.addf %9, %11 : vector<64x128xf32>
    %cst_11 = arith.constant -8.000000e+00 : f32
    %cst_12 = arith.constant 8.000000e+00 : f32
    %13 = vector.broadcast %cst_11 : f32 to vector<64x128xf32>
    %14 = arith.maximumf %13, %12 : vector<64x128xf32>
    %15 = vector.broadcast %cst_12 : f32 to vector<64x128xf32>
    %16 = arith.minimumf %15, %14 : vector<64x128xf32>
    %17 = tpu.iota {dimensions = array<i32: 1>} : vector<64x128xi32>
    %c10_i32 = arith.constant 10 : i32
    %18 = vector.broadcast %c10_i32 : i32 to vector<64x128xi32>
    %19 = arith.cmpi slt, %17, %18 : vector<64x128xi32>
    %cst_13 = arith.constant -1.000000e+30 : f32
    %20 = vector.broadcast %cst_13 : f32 to vector<64x128xf32>
    %21 = arith.select %19, %16, %20 : vector<64x128xi1>, vector<64x128xf32>
    %cst_14 = arith.constant dense<0xFF800000> : vector<64xf32>
    %22 = vector.multi_reduction <maximumf>, %21, %cst_14 [1] : vector<64x128xf32> to vector<64xf32>
    %23 = vector.shape_cast %22 : vector<64xf32> to vector<64x1xf32>
    %24 = vector.broadcast %23 : vector<64x1xf32> to vector<64x128xf32>
    %25 = arith.subf %21, %24 : vector<64x128xf32>
    %26 = math.exp %25 : vector<64x128xf32>
    %cst_15 = arith.constant dense<0.000000e+00> : vector<64xf32>
    %27 = vector.multi_reduction <add>, %26, %cst_15 [1] : vector<64x128xf32> to vector<64xf32>
    %28 = vector.shape_cast %27 : vector<64xf32> to vector<64x1xf32>
    %29 = math.log %28 : vector<64x1xf32>
    %30 = vector.broadcast %29 : vector<64x1xf32> to vector<64x128xf32>
    %31 = arith.subf %25, %30 : vector<64x128xf32>
    %c0_16 = arith.constant 0 : index
    %c0_17 = arith.constant 0 : index
    %32 = vector.load %arg6[%c0_16, %c0_17] : memref<64x128xf32, #tpu.memory_space<vmem>>, vector<64x128xf32>
    tpu.vector_store %arg6[%c0_16, %c0_17], %31 {strides = array<i32>} : memref<64x128xf32, #tpu.memory_space<vmem>>, vector<64x128xf32>,
    return
  }
  func.func @transform_0(%arg0: i32) -> (i32, i32) {
    %c0_i32 = arith.constant 0 : i32
    %c0_i32_0 = arith.constant 0 : i32
    return %arg0, %c0_i32 : i32, i32
  }
  func.func @transform_1(%arg0: i32) -> (i32, i32) {
    %c0_i32 = arith.constant 0 : i32
    %c0_i32_0 = arith.constant 0 : i32
    %c0_i32_1 = arith.constant 0 : i32
    return %c0_i32, %c0_i32_0 : i32, i32
  }
  func.func @transform_2(%arg0: i32) -> (i32, i32) {
    %c0_i32 = arith.constant 0 : i32
    %c0_i32_0 = arith.constant 0 : i32
    %c0_i32_1 = arith.constant 0 : i32
    return %c0_i32, %c0_i32_0 : i32, i32
  }
  func.func @transform_3(%arg0: i32) -> (i32, i32) {
    %c0_i32 = arith.constant 0 : i32
    %c0_i32_0 = arith.constant 0 : i32
    %c0_i32_1 = arith.constant 0 : i32
    return %c0_i32, %c0_i32_0 : i32, i32
  }
  func.func @transform_4(%arg0: i32) -> (i32, i32) {
    %c0_i32 = arith.constant 0 : i32
    %c0_i32_0 = arith.constant 0 : i32
    %c0_i32_1 = arith.constant 0 : i32
    return %c0_i32, %c0_i32_0 : i32, i32
  }
  func.func @transform_5(%arg0: i32) -> (i32, i32) {
    %c0_i32 = arith.constant 0 : i32
    %c0_i32_0 = arith.constant 0 : i32
    return %arg0, %c0_i32 : i32, i32
  }
}

</mosaic_0001>

<llo_original>
// kernel: tpu_custom_call.1
$region0: #{tpu_custom_call.1}
  #allocation0 [shape = 'u32[]', space=smem, size = 0x4, offset = 0x4, fixed_abs, tag = 'smem constant byte address 0x4 - core index']
  #allocation1 [shape = 'u32[144,128]{1,0:T(1,128)}', space=vmem, size = 0x12000, scoped, tag = 'internal scratch']
  %s0 = inlined_call_operand.vmem [shape: f32[256,16], index: 0, kind: input, shape index: {}]
  %s1 = inlined_call_operand.vmem [shape: f32[16,128], index: 1, kind: input, shape index: {}]
  %s2 = inlined_call_operand.vmem [shape: f32[1,128], index: 2, kind: input, shape index: {}]
  %s3 = inlined_call_operand.vmem [shape: f32[128,128], index: 3, kind: input, shape index: {}]
  %s4 = inlined_call_operand.vmem [shape: f32[1,128], index: 4, kind: input, shape index: {}]
  %s5 = inlined_call_operand.hbm [shape: f32[256,128], index: 5, kind: output, shape index: {}]
  %s6 = sld [smem:[#allocation0]]
  $region53: #{tpu_custom_call.1} parent=0
    _
  %s8 = ssub.s32 1, %s6
  %s9 = scalar_select 0, %s8, %s6
  $region1: #{tpu_custom_call.1} parent=0
    #allocation2 [shape = 'u8[65536]{0}', space=vmem, size = 0x10000, scoped, tag = 'output window, operand 0']
    #allocation3 [shape = 's32[2]{0}', space=sflag, size = 0x8, scoped, tag = 'scoped memory for tpu_custom_call.1']
    %10 = vsyncpa [#allocation3], 0
    %s11 = scalar_lea.sflag [#allocation3], 1
    %12 = vsyncpa %s11, 0
    loop: start=0, step=1, limit=6
    $region2: #{tpu_custom_call.1} parent=1 // loop_pre_header
      _
    $region3: #{tpu_custom_call.1} parent=1 // loop_header
      %s14 = sphi 0, %s18
      %p15 = scmp.ge.s32.totalorder %s14, 6
      %s24 = sphi 0, %s26
      %s27 = sphi 0, %s24
      %s28 = sphi 0, %s27
      %s44 = sphi 0, %s28
      %s48 = sphi 0, %s48
      %s50 = sphi 0, %s48
      %s51 = sphi 0, %s50
      %s65 = sphi 0, %s51
      %s69 = sphi 0, %s69
      %s71 = sphi 0, %s69
      %s72 = sphi 0, %s71
      %s86 = sphi 0, %s72
      %s90 = sphi 0, %s90
      %s92 = sphi 0, %s90
      %s93 = sphi 0, %s92
      %s107 = sphi 0, %s93
      %s111 = sphi 0, %s111
      %s113 = sphi 0, %s111
      %s114 = sphi 0, %s113
      %s128 = sphi 0, %s114
      %s134 = sphi 0, %s136
      %s137 = sphi 0, %s134
      %s138 = sphi 0, %s137
      %s154 = sphi 0, %s138
    $region4: #{tpu_custom_call.1} parent=1 // loop_header_branch
      %17 = sbr.rel (%p15) target = $region8
    $region5: #{tpu_custom_call.1} parent=1 // loop_body
      %s19 = ssub.s32 %s14, 1
      %s20 = ssub.s32 %s14, 2
      %s21 = sadd.s32 %s14, 1
      %s22 = ssub.s32 %s14, %s21
      %p23 = scmp.eq.s32.totalorder %s22, 0
      %s25 = sadd.s32 %s24, 1
      %s26 = scalar_select %p23, %s24, %s25
      %p29 = pneg %p23
      %p30 = scmp.eq.s32.totalorder %s14, 3
      %p31 = por %p29, %p30
      %p32 = scmp.ne.s32.totalorder %s24, %s27
      %p33 = scmp.eq.s32.totalorder %s14, 0
      %p34 = por %p32, %p33
      %p35 = scmp.ne.s32.totalorder %s24, %s27
      %p36 = scmp.eq.s32.totalorder %s19, 3
      %p37 = por %p35, %p36
      %p38 = scmp.ne.s32.totalorder %s27, %s28
      %p39 = scmp.eq.s32.totalorder %s19, 0
      %p40 = por %p38, %p39
      %p41 = scmp.ne.s32.totalorder %s27, %s28
      %p42 = scmp.eq.s32.totalorder %s20, 3
      %p43 = por %p41, %p42
      %p45 = scmp.ne.s32.totalorder %s28, %s44
      %p46 = scmp.eq.s32.totalorder %s20, 0
      %p47 = por %p45, %p46
      %s49 = sadd.s32 %s48, 1
      %p52 = scmp.eq.s32.totalorder %s14, 3
      %p53 = scmp.ne.s32.totalorder %s48, %s50
      %p54 = scmp.eq.s32.totalorder %s14, 0
      %p55 = por %p53, %p54
      %p56 = scmp.ne.s32.totalorder %s48, %s50
      %p57 = scmp.eq.s32.totalorder %s19, 3
      %p58 = por %p56, %p57
      %p59 = scmp.ne.s32.totalorder %s50, %s51
      %p60 = scmp.eq.s32.totalorder %s19, 0
      %p61 = por %p59, %p60
      %p62 = scmp.ne.s32.totalorder %s50, %s51
      %p63 = scmp.eq.s32.totalorder %s20, 3
      %p64 = por %p62, %p63
      %p66 = scmp.ne.s32.totalorder %s51, %s65
      %p67 = scmp.eq.s32.totalorder %s20, 0
      %p68 = por %p66, %p67
      %s70 = sadd.s32 %s69, 1
      %p73 = scmp.eq.s32.totalorder %s14, 3
      %p74 = scmp.ne.s32.totalorder %s69, %s71
      %p75 = scmp.eq.s32.totalorder %s14, 0
      %p76 = por %p74, %p75
      %p77 = scmp.ne.s32.totalorder %s69, %s71
      %p78 = scmp.eq.s32.totalorder %s19, 3
      %p79 = por %p77, %p78
      %p80 = scmp.ne.s32.totalorder %s71, %s72
      %p81 = scmp.eq.s32.totalorder %s19, 0
      %p82 = por %p80, %p81
      %p83 = scmp.ne.s32.totalorder %s71, %s72
      %p84 = scmp.eq.s32.totalorder %s20, 3
      %p85 = por %p83, %p84
      %p87 = scmp.ne.s32.totalorder %s72, %s86
      %p88 = scmp.eq.s32.totalorder %s20, 0
      %p89 = por %p87, %p88
      %s91 = sadd.s32 %s90, 1
      %p94 = scmp.eq.s32.totalorder %s14, 3
      %p95 = scmp.ne.s32.totalorder %s90, %s92
      %p96 = scmp.eq.s32.totalorder %s14, 0
      %p97 = por %p95, %p96
      %p98 = scmp.ne.s32.totalorder %s90, %s92
      %p99 = scmp.eq.s32.totalorder %s19, 3
      %p100 = por %p98, %p99
      %p101 = scmp.ne.s32.totalorder %s92, %s93
      %p102 = scmp.eq.s32.totalorder %s19, 0
      %p103 = por %p101, %p102
      %p104 = scmp.ne.s32.totalorder %s92, %s93
      %p105 = scmp.eq.s32.totalorder %s20, 3
      %p106 = por %p104, %p105
      %p108 = scmp.ne.s32.totalorder %s93, %s107
      %p109 = scmp.eq.s32.totalorder %s20, 0
      %p110 = por %p108, %p109
      %s112 = sadd.s32 %s111, 1
      %p115 = scmp.eq.s32.totalorder %s14, 3
      %p116 = scmp.ne.s32.totalorder %s111, %s113
      %p117 = scmp.eq.s32.totalorder %s14, 0
      %p118 = por %p116, %p117
      %p119 = scmp.ne.s32.totalorder %s111, %s113
      %p120 = scmp.eq.s32.totalorder %s19, 3
      %p121 = por %p119, %p120
      %p122 = scmp.ne.s32.totalorder %s113, %s114
      %p123 = scmp.eq.s32.totalorder %s19, 0
      %p124 = por %p122, %p123
      %p125 = scmp.ne.s32.totalorder %s113, %s114
      %p126 = scmp.eq.s32.totalorder %s20, 3
      %p127 = por %p125, %p126
      %p129 = scmp.ne.s32.totalorder %s114, %s128
      %p130 = scmp.eq.s32.totalorder %s20, 0
      %p131 = por %p129, %p130
      %s132 = ssub.s32 %s14, %s21
      %p133 = scmp.eq.s32.totalorder %s132, 0
      %s135 = sadd.s32 %s134, 1
      %s136 = scalar_select %p133, %s134, %s135
      %p139 = pneg %p133
      %p140 = scmp.eq.s32.totalorder %s14, 3
      %p141 = por %p139, %p140
      %p142 = scmp.ne.s32.totalorder %s134, %s137
      %p143 = scmp.eq.s32.totalorder %s14, 0
      %p144 = por %p142, %p143
      %p145 = scmp.ne.s32.totalorder %s134, %s137
      %p146 = scmp.eq.s32.totalorder %s19, 3
      %p147 = por %p145, %p146
      %p148 = scmp.ne.s32.totalorder %s137, %s138
      %p149 = scmp.eq.s32.totalorder %s19, 0
      %p150 = por %p148, %p149
      %p151 = scmp.ne.s32.totalorder %s137, %s138
      %p152 = scmp.eq.s32.totalorder %s20, 3
      %p153 = por %p151, %p152
      %p155 = scmp.ne.s32.totalorder %s138, %s154
      %p156 = scmp.eq.s32.totalorder %s20, 0
      %p157 = por %p155, %p156
      %p158 = scmp.le.s32.totalorder 1, %s14
      %p159 = scmp.lt.s32.totalorder %s14, 5
      %p160 = pnand %p158, %p159
      %p161 = pneg %p160
      // Predicated region
      $region9: #{tpu_custom_call.1} parent=5 // pred_check
        _
      $region10: #{tpu_custom_call.1} parent=5 // pred_check_branch
        %163 = sbr.rel (%p160) target = $region12
      $region11: #{tpu_custom_call.1} parent=5 // pred_region
        %s164 = ssub.s32 %s14, 1
        // Predicated region
        $region13: #{tpu_custom_call.1} parent=11 // pred_check
          %p165 = pneg %p61
        $region14: #{tpu_custom_call.1} parent=11 // pred_check_branch
          %167 = sbr.rel (%p165) target = $region16
        $region15: #{tpu_custom_call.1} parent=11 // pred_region
          _
        $region16: #{tpu_custom_call.1} parent=11 // pred_fallthru
          _
        // Predicated region
        $region17: #{tpu_custom_call.1} parent=11 // pred_check
          %p168 = pneg %p82
        $region18: #{tpu_custom_call.1} parent=11 // pred_check_branch
          %170 = sbr.rel (%p168) target = $region20
        $region19: #{tpu_custom_call.1} parent=11 // pred_region
          _
        $region20: #{tpu_custom_call.1} parent=11 // pred_fallthru
          _
        // Predicated region
        $region21: #{tpu_custom_call.1} parent=11 // pred_check
          %p171 = pneg %p103
        $region22: #{tpu_custom_call.1} parent=11 // pred_check_branch
          %173 = sbr.rel (%p171) target = $region24
        $region23: #{tpu_custom_call.1} parent=11 // pred_region
          _
        $region24: #{tpu_custom_call.1} parent=11 // pred_fallthru
          _
        // Predicated region
        $region25: #{tpu_custom_call.1} parent=11 // pred_check
          %p174 = pneg %p124
        $region26: #{tpu_custom_call.1} parent=11 // pred_check_branch
          %176 = sbr.rel (%p174) target = $region28
        $region27: #{tpu_custom_call.1} parent=11 // pred_region
          _
        $region28: #{tpu_custom_call.1} parent=11 // pred_fallthru
          _
      $region12: #{tpu_custom_call.1} parent=5 // pred_fallthru
        _
      %p177 = scmp.lt.s32.totalorder %s14, 4
      // Predicated region
      $region29: #{tpu_custom_call.1} parent=5 // pred_check
        %p178 = pneg %p177
      $region30: #{tpu_custom_call.1} parent=5 // pred_check_branch
        %180 = sbr.rel (%p178) target = $region32
      $region31: #{tpu_custom_call.1} parent=5 // pred_region
        // Predicated region
        $region33: #{tpu_custom_call.1} parent=31 // pred_check
          %p181 = pneg %p34
        $region34: #{tpu_custom_call.1} parent=31 // pred_check_branch
          %183 = sbr.rel (%p181) target = $region36
        $region35: #{tpu_custom_call.1} parent=31 // pred_region
          %s184 = smul.u32 8, %s14
          %p185 = scmp.lt.s32.totalorder %s184, 31
          %s186 = scalar_select %p185, %s184, 31
          %s187 = smul.addr %s186, 8
          %s188 = scalar_lea.vmem %s0, %s187
          %s189 = smul.u32 8, %s14
        $region36: #{tpu_custom_call.1} parent=31 // pred_fallthru
          _
      $region32: #{tpu_custom_call.1} parent=5 // pred_fallthru
        _
      %p190 = scmp.le.s32.totalorder 1, %s14
      %p191 = scmp.lt.s32.totalorder %s14, 5
      %p192 = pnand %p190, %p191
      %p193 = pneg %p192
      // Predicated region
      $region37: #{tpu_custom_call.1} parent=5 // pred_check
        _
      $region38: #{tpu_custom_call.1} parent=5 // pred_check_branch
        %195 = sbr.rel (%p192) target = $region40
      $region39: #{tpu_custom_call.1} parent=5 // pred_region
        %s196 = ssub.s32 %s14, 1
        %s197 = smul.u32 8, %s19
        %p198 = scmp.lt.s32.totalorder %s197, 31
        %s199 = scalar_select %p198, %s197, 31
        %s200 = smul.addr %s199, 8
        %s201 = scalar_lea.vmem %s0, %s200
        %p202 = pneg %p40
        %p203 = pneg %p37
        %p204 = pneg %p61
        %p205 = pneg %p58
        %p206 = pneg %p82
        %p207 = pneg %p79
        %p208 = pneg %p103
        %p209 = pneg %p100
        %p210 = pneg %p124
        %p211 = pneg %p121
        %p212 = pneg %p150
        %p213 = pneg %p147
        %s214 = sand.u32 %s137, 1
        %s215 = scalar_lea.sflag [#allocation3], %s214
        %s216 = sand.u32 %s137, 1
        %s217 = smul.addr %s216, 64
        %s218 = scalar_lea.vmem [#allocation2], %s217
        %s219 = smul.u32 8, %s19
        %p220 = scmp.lt.s32.totalorder %s219, 31
        %s221 = scalar_select %p220, %s219, 31
        %s222 = smul.addr %s221, 8
        %s223 = scalar_lea.vmem %s0, %s222
        %s224 = smul.u32 8, %s19
        %s225 = smul.u32 8, %s19
        %v226 = vld [vmem:[%s223] sm:$0xff]
        %v227 = vld [vmem:[%s223 + $0x8] sm:$0xff]
        %v228 = vld [vmem:[%s223 + $0x10] sm:$0xff]
        %v229 = vld [vmem:[%s223 + $0x18] sm:$0xff]
        %v230 = vld [vmem:[%s223 + $0x20] sm:$0xff]
        %v231 = vld [vmem:[%s223 + $0x28] sm:$0xff]
        %v232 = vld [vmem:[%s223 + $0x30] sm:$0xff]
        %v233 = vld [vmem:[%s223 + $0x38] sm:$0xff]
        %v234 = vld [vmem:[%s1] sm:$0xff]
        %v235 = vld [vmem:[%s1 + $0x8] sm:$0xff]
        %v236 = vld [vmem:[%s2] sm:$0x1]
        %v238 = vlaneseq
        %v239 = vshrl.u32 %v238, 7
        %v240 = vsub.s32 0, %v239
        %v241 = vrot.slane %v236, %v240
        %vm243 = vcmask 130048
        %v245 = vsel %vm243, %v226, 0
        %v248 = vsel %vm243, %v227, 0
        %v251 = vsel %vm243, %v228, 0
        %v254 = vsel %vm243, %v229, 0
        %v257 = vsel %vm243, %v230, 0
        %v260 = vsel %vm243, %v231, 0
        %v263 = vsel %vm243, %v232, 0
        %v266 = vsel %vm243, %v233, 0
        %268 = vmatprep.subr.mxu0 0.0
        %269 = vmatpush1.msra.mxu0 %v234
        %270 = vmatprep.subr.mxu0 0.0
        %271 = vmatpush1.msra.mxu0 %v235
        %272 = vmatprep.subr.mxu0 0.0
        %273 = vmatpush1.msra.mxu0 0.0
        %274 = vmatprep.subr.mxu0 0.0
        %275 = vmatpush1.msra.mxu0 0.0
        %276 = vmatprep.subr.mxu0 0.0
        %277 = vmatpush1.msra.mxu0 0.0
        %278 = vmatprep.subr.mxu0 0.0
        %279 = vmatpush1.msra.mxu0 0.0
        %280 = vmatprep.subr.mxu0 0.0
        %281 = vmatpush1.msra.mxu0 0.0
        %282 = vmatprep.subr.mxu0 0.0
        %283 = vmatpush1.msra.mxu0 0.0
        %284 = vmatprep.subr.mxu0 0.0
        %285 = vmatpush1.msra.mxu0 0.0
        %286 = vmatprep.subr.mxu0 0.0
        %287 = vmatpush1.msra.mxu0 0.0
        %288 = vmatprep.subr.mxu0 0.0
        %289 = vmatpush1.msra.mxu0 0.0
        %290 = vmatprep.subr.mxu0 0.0
        %291 = vmatpush1.msra.mxu0 0.0
        %292 = vmatprep.subr.mxu0 0.0
        %293 = vmatpush1.msra.mxu0 0.0
        %294 = vmatprep.subr.mxu0 0.0
        %295 = vmatpush1.msra.mxu0 0.0
        %296 = vmatprep.subr.mxu0 0.0
        %297 = vmatpush1.msra.mxu0 0.0
        %298 = vmatprep.subr.mxu0 0.0
        %299 = vmatpush1.msra.mxu0 0.0
        %300 = vmatprep.subr.mxu0 0.0
        %301 = vmatpush1.msra.mxu0 0.0
        %302 = vmatprep.subr.mxu0 0.0
        %303 = vmatpush1.msra.mxu0 0.0
        %304 = vmatprep.subr.mxu0 0.0
        %305 = vmatpush1.msra.mxu0 0.0
        %306 = vmatprep.subr.mxu0 0.0
        %307 = vmatpush1.msra.mxu0 0.0
        %308 = vmatprep.subr.mxu0 0.0
        %309 = vmatpush1.msra.mxu0 0.0
        %310 = vmatprep.subr.mxu0 0.0
        %311 = vmatpush1.msra.mxu0 0.0
        %312 = vmatprep.subr.mxu0 0.0
        %313 = vmatpush1.msra.mxu0 0.0
        %314 = vmatprep.subr.mxu0 0.0
        %315 = vmatpush1.msra.mxu0 0.0
        %316 = vmatprep.subr.mxu0 0.0
        %317 = vmatpush1.msra.mxu0 0.0
        %318 = vmatprep.subr.mxu0 0.0
        %319 = vmatpush1.msra.mxu0 0.0
        %320 = vmatprep.subr.mxu0 0.0
        %321 = vmatpush1.msra.mxu0 0.0
        %322 = vmatprep.subr.mxu0 0.0
        %323 = vmatpush1.msra.mxu0 0.0
        %324 = vmatprep.subr.mxu0 0.0
        %325 = vmatpush1.msra.mxu0 0.0
        %326 = vmatprep.subr.mxu0 0.0
        %327 = vmatpush1.msra.mxu0 0.0
        %328 = vmatprep.subr.mxu0 0.0
        %329 = vmatpush1.msra.mxu0 0.0
        %330 = vmatprep.subr.mxu0 0.0
        %331 = vmatpush1.msra.mxu0 0.0
        %332 = vmatprep.mubr.f32.mxu0 0.0
        %333 = vmatmul.mubr.f32.gmra.mrb[0].mxu0 %v245
        %v334 = vpop.f32.mrb[0].mxu0
        %v335 = vadd.f32 %v241, %v334
        %v336 = vpop.f32.mrb[0].mxu0
        %337 = vmatprep.mubr.f32.mxu0 0.0
        %338 = vmatmul.mubr.f32.gmra.mrb[0].mxu0 %v248
        %v339 = vpop.f32.mrb[0].mxu0
        %v340 = vadd.f32 %v241, %v339
        %v341 = vpop.f32.mrb[0].mxu0
        %342 = vmatprep.mubr.f32.mxu0 0.0
        %343 = vmatmul.mubr.f32.gmra.mrb[0].mxu0 %v251
        %v344 = vpop.f32.mrb[0].mxu0
        %v345 = vadd.f32 %v241, %v344
        %v346 = vpop.f32.mrb[0].mxu0
        %347 = vmatprep.mubr.f32.mxu0 0.0
        %348 = vmatmul.mubr.f32.gmra.mrb[0].mxu0 %v254
        %v349 = vpop.f32.mrb[0].mxu0
        %v350 = vadd.f32 %v241, %v349
        %v351 = vpop.f32.mrb[0].mxu0
        %352 = vmatprep.mubr.f32.mxu0 0.0
        %353 = vmatmul.mubr.f32.gmra.mrb[0].mxu0 %v257
        %v354 = vpop.f32.mrb[0].mxu0
        %v355 = vadd.f32 %v241, %v354
        %v356 = vpop.f32.mrb[0].mxu0
        %357 = vmatprep.mubr.f32.mxu0 0.0
        %358 = vmatmul.mubr.f32.gmra.mrb[0].mxu0 %v260
        %v359 = vpop.f32.mrb[0].mxu0
        %v360 = vadd.f32 %v241, %v359
        %v361 = vpop.f32.mrb[0].mxu0
        %362 = vmatprep.mubr.f32.mxu0 0.0
        %363 = vmatmul.mubr.f32.gmra.mrb[0].mxu0 %v263
        %v364 = vpop.f32.mrb[0].mxu0
        %v365 = vadd.f32 %v241, %v364
        %v366 = vpop.f32.mrb[0].mxu0
        %367 = vmatprep.mubr.f32.mxu0 0.0
        %368 = vmatmul.mubr.f32.gmra.mrb[0].mxu0 %v266
        %v369 = vpop.f32.mrb[0].mxu0
        %v370 = vadd.f32 %v241, %v369
        %v371 = vpop.f32.mrb[0].mxu0
        %372 = vdwg.mxu0
        %v373 = vmax.f32 %v335, 0.0
        %v374 = vmax.f32 %v340, 0.0
        %v375 = vmax.f32 %v345, 0.0
        %v376 = vmax.f32 %v350, 0.0
        %v377 = vmax.f32 %v355, 0.0
        %v378 = vmax.f32 %v360, 0.0
        %v379 = vmax.f32 %v365, 0.0
        %v380 = vmax.f32 %v370, 0.0
        %v381 = vld [vmem:[%s3] sm:$0xff]
        %v382 = vld [vmem:[%s3 + $0x8] sm:$0xff]
        %v383 = vld [vmem:[%s3 + $0x10] sm:$0xff]
        %v384 = vld [vmem:[%s3 + $0x18] sm:$0xff]
        %v385 = vld [vmem:[%s3 + $0x20] sm:$0xff]
        %v386 = vld [vmem:[%s3 + $0x28] sm:$0xff]
        %v387 = vld [vmem:[%s3 + $0x30] sm:$0xff]
        %v388 = vld [vmem:[%s3 + $0x38] sm:$0xff]
        %v389 = vld [vmem:[%s3 + $0x40] sm:$0xff]
        %v390 = vld [vmem:[%s3 + $0x48] sm:$0xff]
        %v391 = vld [vmem:[%s3 + $0x50] sm:$0xff]
        %v392 = vld [vmem:[%s3 + $0x58] sm:$0xff]
        %v393 = vld [vmem:[%s3 + $0x60] sm:$0xff]
        %v394 = vld [vmem:[%s3 + $0x68] sm:$0xff]
        %v395 = vld [vmem:[%s3 + $0x70] sm:$0xff]
        %v396 = vld [vmem:[%s3 + $0x78] sm:$0xff]
        %v397 = vld [vmem:[%s4] sm:$0x1]
        %v399 = vlaneseq
        %v400 = vshrl.u32 %v399, 7
        %v401 = vsub.s32 0, %v400
        %v402 = vrot.slane %v397, %v401
        %404 = vmatprep.subr.mxu0 0.0
        %405 = vmatpush1.msra.mxu0 %v381
        %406 = vmatprep.subr.mxu0 0.0
        %407 = vmatpush1.msra.mxu0 %v382
        %408 = vmatprep.subr.mxu0 0.0
        %409 = vmatpush1.msra.mxu0 %v383
        %410 = vmatprep.subr.mxu0 0.0
        %411 = vmatpush1.msra.mxu0 %v384
        %412 = vmatprep.subr.mxu0 0.0
        %413 = vmatpush1.msra.mxu0 %v385
        %414 = vmatprep.subr.mxu0 0.0
        %415 = vmatpush1.msra.mxu0 %v386
        %416 = vmatprep.subr.mxu0 0.0
        %417 = vmatpush1.msra.mxu0 %v387
        %418 = vmatprep.subr.mxu0 0.0
        %419 = vmatpush1.msra.mxu0 %v388
        %420 = vmatprep.subr.mxu0 0.0
        %421 = vmatpush1.msra.mxu0 %v389
        %422 = vmatprep.subr.mxu0 0.0
        %423 = vmatpush1.msra.mxu0 %v390
        %424 = vmatprep.subr.mxu0 0.0
        %425 = vmatpush1.msra.mxu0 %v391
        %426 = vmatprep.subr.mxu0 0.0
        %427 = vmatpush1.msra.mxu0 %v392
        %428 = vmatprep.subr.mxu0 0.0
        %429 = vmatpush1.msra.mxu0 %v393
        %430 = vmatprep.subr.mxu0 0.0
        %431 = vmatpush1.msra.mxu0 %v394
        %432 = vmatprep.subr.mxu0 0.0
        %433 = vmatpush1.msra.mxu0 %v395
        %434 = vmatprep.subr.mxu0 0.0
        %435 = vmatpush1.msra.mxu0 %v396
        %436 = vmatprep.subr.mxu0 0.0
        %437 = vmatpush1.msra.mxu0 0.0
        %438 = vmatprep.subr.mxu0 0.0
        %439 = vmatpush1.msra.mxu0 0.0
        %440 = vmatprep.subr.mxu0 0.0
        %441 = vmatpush1.msra.mxu0 0.0
        %442 = vmatprep.subr.mxu0 0.0
        %443 = vmatpush1.msra.mxu0 0.0
        %444 = vmatprep.subr.mxu0 0.0
        %445 = vmatpush1.msra.mxu0 0.0
        %446 = vmatprep.subr.mxu0 0.0
        %447 = vmatpush1.msra.mxu0 0.0
        %448 = vmatprep.subr.mxu0 0.0
        %449 = vmatpush1.msra.mxu0 0.0
        %450 = vmatprep.subr.mxu0 0.0
        %451 = vmatpush1.msra.mxu0 0.0
        %452 = vmatprep.subr.mxu0 0.0
        %453 = vmatpush1.msra.mxu0 0.0
        %454 = vmatprep.subr.mxu0 0.0
        %455 = vmatpush1.msra.mxu0 0.0
        %456 = vmatprep.subr.mxu0 0.0
        %457 = vmatpush1.msra.mxu0 0.0
        %458 = vmatprep.subr.mxu0 0.0
        %459 = vmatpush1.msra.mxu0 0.0
        %460 = vmatprep.subr.mxu0 0.0
        %461 = vmatpush1.msra.mxu0 0.0
        %462 = vmatprep.subr.mxu0 0.0
        %463 = vmatpush1.msra.mxu0 0.0
        %464 = vmatprep.subr.mxu0 0.0
        %465 = vmatpush1.msra.mxu0 0.0
        %466 = vmatprep.subr.mxu0 0.0
        %467 = vmatpush1.msra.mxu0 0.0
        %468 = vmatprep.mubr.f32.mxu0 0.0
        %469 = vmatmul.mubr.f32.gmra.mrb[0].mxu0 %v373
        %v470 = vpop.f32.mrb[0].mxu0
        %v471 = vadd.f32 %v402, %v470
        %v472 = vpop.f32.mrb[0].mxu0
        %473 = vmatprep.mubr.f32.mxu0 0.0
        %474 = vmatmul.mubr.f32.gmra.mrb[0].mxu0 %v374
        %v475 = vpop.f32.mrb[0].mxu0
        %v476 = vadd.f32 %v402, %v475
        %v477 = vpop.f32.mrb[0].mxu0
        %478 = vmatprep.mubr.f32.mxu0 0.0
        %479 = vmatmul.mubr.f32.gmra.mrb[0].mxu0 %v375
        %v480 = vpop.f32.mrb[0].mxu0
        %v481 = vadd.f32 %v402, %v480
        %v482 = vpop.f32.mrb[0].mxu0
        %483 = vmatprep.mubr.f32.mxu0 0.0
        %484 = vmatmul.mubr.f32.gmra.mrb[0].mxu0 %v376
        %v485 = vpop.f32.mrb[0].mxu0
        %v486 = vadd.f32 %v402, %v485
        %v487 = vpop.f32.mrb[0].mxu0
        %488 = vmatprep.mubr.f32.mxu0 0.0
        %489 = vmatmul.mubr.f32.gmra.mrb[0].mxu0 %v377
        %v490 = vpop.f32.mrb[0].mxu0
        %v491 = vadd.f32 %v402, %v490
        %v492 = vpop.f32.mrb[0].mxu0
        %493 = vmatprep.mubr.f32.mxu0 0.0
        %494 = vmatmul.mubr.f32.gmra.mrb[0].mxu0 %v378
        %v495 = vpop.f32.mrb[0].mxu0
        %v496 = vadd.f32 %v402, %v495
        %v497 = vpop.f32.mrb[0].mxu0
        %498 = vmatprep.mubr.f32.mxu0 0.0
        %499 = vmatmul.mubr.f32.gmra.mrb[0].mxu0 %v379
        %v500 = vpop.f32.mrb[0].mxu0
        %v501 = vadd.f32 %v402, %v500
        %v502 = vpop.f32.mrb[0].mxu0
        %503 = vmatprep.mubr.f32.mxu0 0.0
        %504 = vmatmul.mubr.f32.gmra.mrb[0].mxu0 %v380
        %v505 = vpop.f32.mrb[0].mxu0
        %v506 = vadd.f32 %v402, %v505
        %v507 = vpop.f32.mrb[0].mxu0
        %508 = vdwg.mxu0
        %v509 = vmax.f32 %v471, -8.0
        %v510 = vmax.f32 %v476, -8.0
        %v511 = vmax.f32 %v481, -8.0
        %v512 = vmax.f32 %v486, -8.0
        %v513 = vmax.f32 %v491, -8.0
        %v514 = vmax.f32 %v496, -8.0
        %v515 = vmax.f32 %v501, -8.0
        %v516 = vmax.f32 %v506, -8.0
        %v517 = vmin.f32 %v509, 8.0
        %v518 = vmin.f32 %v510, 8.0
        %v519 = vmin.f32 %v511, 8.0
        %v520 = vmin.f32 %v512, 8.0
        %v521 = vmin.f32 %v513, 8.0
        %v522 = vmin.f32 %v514, 8.0
        %v523 = vmin.f32 %v515, 8.0
        %v524 = vmin.f32 %v516, 8.0
        %v525 = vlaneseq
        %v526 = vand.u32 %v525, 127
        %vm527 = vcmp.lt.s32.totalorder %v526, 10
        %v528 = vsel %vm527, %v517, -1e+30
        %v529 = vsel %vm527, %v518, -1e+30
        %v530 = vsel %vm527, %v519, -1e+30
        %v531 = vsel %vm527, %v520, -1e+30
        %v532 = vsel %vm527, %v521, -1e+30
        %v533 = vsel %vm527, %v522, -1e+30
        %v534 = vsel %vm527, %v523, -1e+30
        %v535 = vsel %vm527, %v524, -1e+30
        %536 = vmax.xlane.f32.xlu0 %v528
        %v537 = vpop.xlane.xlu0 %536
        %538 = vmax.xlane.f32.xlu0 %v529
        %v539 = vpop.xlane.xlu0 %538
        %540 = vmax.xlane.f32.xlu0 %v530
        %v541 = vpop.xlane.xlu0 %540
        %542 = vmax.xlane.f32.xlu0 %v531
        %v543 = vpop.xlane.xlu0 %542
        %544 = vmax.xlane.f32.xlu0 %v532
        %v545 = vpop.xlane.xlu0 %544
        %546 = vmax.xlane.f32.xlu0 %v533
        %v547 = vpop.xlane.xlu0 %546
        %548 = vmax.xlane.f32.xlu0 %v534
        %v549 = vpop.xlane.xlu0 %548
        %550 = vmax.xlane.f32.xlu0 %v535
        %v551 = vpop.xlane.xlu0 %550
        %v552 = vsub.f32 %v528, %v537
        %v553 = vsub.f32 %v529, %v539
        %v554 = vsub.f32 %v530, %v541
        %v555 = vsub.f32 %v531, %v543
        %v556 = vsub.f32 %v532, %v545
        %v557 = vsub.f32 %v533, %v547
        %v558 = vsub.f32 %v534, %v549
        %v559 = vsub.f32 %v535, %v551
        %v560 = vmul.f32 %v552, 1.442695
        %v561 = vpow.pop %v560
        %v562 = vmul.f32 %v553, 1.442695
        %v563 = vpow.pop %v562
        %v564 = vmul.f32 %v554, 1.442695
        %v565 = vpow.pop %v564
        %v566 = vmul.f32 %v555, 1.442695
        %v567 = vpow.pop %v566
        %v568 = vmul.f32 %v556, 1.442695
        %v569 = vpow.pop %v568
        %v570 = vmul.f32 %v557, 1.442695
        %v571 = vpow.pop %v570
        %v572 = vmul.f32 %v558, 1.442695
        %v573 = vpow.pop %v572
        %v574 = vmul.f32 %v559, 1.442695
        %v575 = vpow.pop %v574
        %576 = vadd.xlane.f32.xlu0 %v561
        %v577 = vpop.xlane.xlu0 %576
        %578 = vadd.xlane.f32.xlu0 %v563
        %v579 = vpop.xlane.xlu0 %578
        %580 = vadd.xlane.f32.xlu0 %v565
        %v581 = vpop.xlane.xlu0 %580
        %582 = vadd.xlane.f32.xlu0 %v567
        %v583 = vpop.xlane.xlu0 %582
        %584 = vadd.xlane.f32.xlu0 %v569
        %v585 = vpop.xlane.xlu0 %584
        %586 = vadd.xlane.f32.xlu0 %v571
        %v587 = vpop.xlane.xlu0 %586
        %588 = vadd.xlane.f32.xlu0 %v573
        %v589 = vpop.xlane.xlu0 %588
        %590 = vadd.xlane.f32.xlu0 %v575
        %v591 = vpop.xlane.xlu0 %590
        %v592 = vlog2.pop %v577
        %v593 = vmul.f32 %v592, 0.6931472
        %v594 = vlog2.pop %v579
        %v595 = vmul.f32 %v594, 0.6931472
        %v596 = vlog2.pop %v581
        %v597 = vmul.f32 %v596, 0.6931472
        %v598 = vlog2.pop %v583
        %v599 = vmul.f32 %v598, 0.6931472
        %v600 = vlog2.pop %v585
        %v601 = vmul.f32 %v600, 0.6931472
        %v602 = vlog2.pop %v587
        %v603 = vmul.f32 %v602, 0.6931472
        %v604 = vlog2.pop %v589
        %v605 = vmul.f32 %v604, 0.6931472
        %v606 = vlog2.pop %v591
        %v607 = vmul.f32 %v606, 0.6931472
        %v608 = vsub.f32 %v552, %v593
        %v609 = vsub.f32 %v553, %v595
        %v610 = vsub.f32 %v554, %v597
        %v611 = vsub.f32 %v555, %v599
        %v612 = vsub.f32 %v556, %v601
        %v613 = vsub.f32 %v557, %v603
        %v614 = vsub.f32 %v558, %v605
        %v615 = vsub.f32 %v559, %v607
        %616 = vst [vmem:[%s218] sm:$0xff] %v608
        %617 = vst [vmem:[%s218 + $0x8] sm:$0xff] %v609
        %618 = vst [vmem:[%s218 + $0x10] sm:$0xff] %v610
        %619 = vst [vmem:[%s218 + $0x18] sm:$0xff] %v611
        %620 = vst [vmem:[%s218 + $0x20] sm:$0xff] %v612
        %621 = vst [vmem:[%s218 + $0x28] sm:$0xff] %v613
        %622 = vst [vmem:[%s218 + $0x30] sm:$0xff] %v614
        %623 = vst [vmem:[%s218 + $0x38] sm:$0xff] %v615
        %s624 = sand.u32 %s137, 1
        %s625 = scalar_lea.sflag [#allocation3], %s624
        %s626 = sand.u32 %s137, 1
        %s627 = smul.addr %s626, 64
        %s628 = scalar_lea.vmem [#allocation2], %s627
        // Predicated region
        $region41: #{tpu_custom_call.1} parent=39 // pred_check
          %p629 = pneg %p147
        $region42: #{tpu_custom_call.1} parent=39 // pred_check_branch
          %631 = sbr.rel (%p629) target = $region44
        $region43: #{tpu_custom_call.1} parent=39 // pred_region
          %s632 = smul.u32 8, %s19
          %s634 = ssub.s32 1024, 1024
          %635 = vsyncadd %s625, %s634
          %s636 = smul.addr %s632, 128
          %s637 = scalar_lea.hbm %s5, %s636
          %s638 = sshll.u32 %s628, 4
          %s639 = int_to_ptr.vmem [resolvable:$true] %s638
          %644 = dma.vmem_to_hbm [thread:$0]  %s639, 1024, %s637, %s625, 128, 128, 8
        $region44: #{tpu_custom_call.1} parent=39 // pred_fallthru
          _
      $region40: #{tpu_custom_call.1} parent=5 // pred_fallthru
        _
      %p645 = scmp.le.s32.totalorder 2, %s14
      // Predicated region
      $region45: #{tpu_custom_call.1} parent=5 // pred_check
        %p646 = pneg %p645
      $region46: #{tpu_custom_call.1} parent=5 // pred_check_branch
        %648 = sbr.rel (%p646) target = $region48
      $region47: #{tpu_custom_call.1} parent=5 // pred_region
        %s649 = ssub.s32 %s14, 2
        // Predicated region
        $region49: #{tpu_custom_call.1} parent=47 // pred_check
          %p650 = pneg %p153
        $region50: #{tpu_custom_call.1} parent=47 // pred_check_branch
          %652 = sbr.rel (%p650) target = $region52
        $region51: #{tpu_custom_call.1} parent=47 // pred_region
          %s653 = sand.u32 %s138, 1
          %s654 = scalar_lea.sflag [#allocation3], %s653
          %s655 = sand.u32 %s138, 1
          %s656 = smul.addr %s655, 64
          %s657 = scalar_lea.vmem [#allocation2], %s656
          %658 = dma.done %s654, 1024
        $region52: #{tpu_custom_call.1} parent=47 // pred_fallthru
          _
      $region48: #{tpu_custom_call.1} parent=5 // pred_fallthru
        _
    $region6: #{tpu_custom_call.1} parent=1 // loop_footer
      %s18 = sadd.s32 1, %s14
    $region7: #{tpu_custom_call.1} parent=1 // loop_footer_branch
      %13 = sbr.rel target = $region3
    $region8: #{tpu_custom_call.1} parent=1 // loop_exit
      _
    %659 = vsyncpa [#allocation3], 1
    %s660 = scalar_lea.sflag [#allocation3], 1
    %661 = vsyncpa %s660, 1

</llo_original>
